<compile_context>
chip_gen: v6e
topology: v6e:2x2x1
jax: 0.10.0
libtpu: 0.0.40
codegen_flags: <defaults>
</compile_context>

<pallas_src>
import functools
import math

import jax
import jax.numpy as jnp
from jax.experimental import pallas as pl
from jax.experimental.pallas import tpu as pltpu

_VMEM_LIMIT = 32 * 1024 * 1024  # conservative: fits default scoped VMEM on v5e/v6e/v7x


def _tile(dim, target, align):
    """Largest tile <= target that is a multiple of `align` and divides `dim`.
    Falls back to the full dim (which always satisfies the (8,128) rule)."""
    if dim <= target:
        return dim
    t = (target // align) * align
    while t >= align:
        if dim % t == 0:
            return t
        t -= align
    return dim


# ----------------------------- Pallas kernels ------------------------------

def _linear_kernel(x_ref, w_ref, b_ref, o_ref, acc_ref, *, activation):
    @pl.when(pl.program_id(2) == 0)
    def _():
        acc_ref[...] = jnp.zeros_like(acc_ref)

    acc_ref[...] += jnp.dot(x_ref[...], w_ref[...],
                            preferred_element_type=jnp.float32)

    @pl.when(pl.program_id(2) == pl.num_programs(2) - 1)
    def _():
        y = acc_ref[...] + b_ref[...]
        if activation == "gelu":      # exact (erf) GELU, matching HF BERT
            y = 0.5 * y * (1.0 + jax.lax.erf(y * jnp.float32(1.0 / math.sqrt(2.0))))
        elif activation == "tanh":
            y = jnp.tanh(y)
        o_ref[...] = y.astype(o_ref.dtype)


def pallas_linear(x, w, b, activation="none", out_dtype=jnp.bfloat16,
                  tm=256, tn=512, tk=512):
    """y = act(x @ w + b); bf16 matmul inputs, f32 accumulation, tiled + pipelined."""
    M, K = x.shape
    N = w.shape[1]
    tm = _tile(M, tm, 8)
    tn = _tile(N, tn, 128)
    tk = _tile(K, tk, 128)
    kern = functools.partial(_linear_kernel, activation=activation)
    return pl.pallas_call(
        kern,
        out_shape=jax.ShapeDtypeStruct((M, N), out_dtype),
        grid=(M // tm, N // tn, K // tk),
        in_specs=[
            pl.BlockSpec((tm, tk), lambda i, j, k: (i, k)),
            pl.BlockSpec((tk, tn), lambda i, j, k: (k, j)),
            pl.BlockSpec((1, tn), lambda i, j, k: (0, j)),
        ],
        out_specs=pl.BlockSpec((tm, tn), lambda i, j, k: (i, j)),
        scratch_shapes=[pltpu.VMEM((tm, tn), jnp.float32)],
        compiler_params=pltpu.CompilerParams(
            dimension_semantics=("parallel", "parallel", "arbitrary"),
            vmem_limit_bytes=_VMEM_LIMIT),
    )(x.astype(jnp.bfloat16), w.astype(jnp.bfloat16),
      b.reshape(1, N).astype(jnp.float32))


def _linear_res_ln_kernel(x_ref, w_ref, b_ref, r_ref, g_ref, be_ref,
                          o_ref, acc_ref, *, eps):
    @pl.when(pl.program_id(1) == 0)
    def _():
        acc_ref[...] = jnp.zeros_like(acc_ref)

    acc_ref[...] += jnp.dot(x_ref[...], w_ref[...],
                            preferred_element_type=jnp.float32)

    @pl.when(pl.program_id(1) == pl.num_programs(1) - 1)
    def _():
        h = acc_ref[...] + b_ref[...] + r_ref[...].astype(jnp.float32)
        mu = jnp.mean(h, axis=-1, keepdims=True)
        var = jnp.mean(jnp.square(h - mu), axis=-1, keepdims=True)
        y = (h - mu) * jax.lax.rsqrt(var + eps) * g_ref[...] + be_ref[...]
        o_ref[...] = y.astype(o_ref.dtype)


def pallas_linear_residual_ln(x, w, b, residual, gamma, beta, eps=1e-12,
                              out_dtype=jnp.bfloat16, tm=256, tk=512):
    """y = LayerNorm(x @ w + b + residual) fused in the GEMM epilogue.
    N (=hidden) is kept whole per block since LN reduces over it."""
    M, K = x.shape
    N = w.shape[1]
    tm = _tile(M, tm, 8)
    tk = _tile(K, tk, 128)
    kern = functools.partial(_linear_res_ln_kernel, eps=eps)
    return pl.pallas_call(
        kern,
        out_shape=jax.ShapeDtypeStruct((M, N), out_dtype),
        grid=(M // tm, K // tk),
        in_specs=[
            pl.BlockSpec((tm, tk), lambda i, k: (i, k)),
            pl.BlockSpec((tk, N), lambda i, k: (k, 0)),
            pl.BlockSpec((1, N), lambda i, k: (0, 0)),
            pl.BlockSpec((tm, N), lambda i, k: (i, 0)),
            pl.BlockSpec((1, N), lambda i, k: (0, 0)),
            pl.BlockSpec((1, N), lambda i, k: (0, 0)),
        ],
        out_specs=pl.BlockSpec((tm, N), lambda i, k: (i, 0)),
        scratch_shapes=[pltpu.VMEM((tm, N), jnp.float32)],
        compiler_params=pltpu.CompilerParams(
            dimension_semantics=("parallel", "arbitrary"),
            vmem_limit_bytes=_VMEM_LIMIT),
    )(x.astype(jnp.bfloat16), w.astype(jnp.bfloat16),
      b.reshape(1, N).astype(jnp.float32),
      residual,
      gamma.reshape(1, N).astype(jnp.float32),
      beta.reshape(1, N).astype(jnp.float32))


def _ln_kernel(x_ref, g_ref, b_ref, o_ref, *, eps):
    h = x_ref[...].astype(jnp.float32)
    mu = jnp.mean(h, axis=-1, keepdims=True)
    var = jnp.mean(jnp.square(h - mu), axis=-1, keepdims=True)
    o_ref[...] = ((h - mu) * jax.lax.rsqrt(var + eps)
                  * g_ref[...] + b_ref[...]).astype(o_ref.dtype)


def pallas_layernorm(x, gamma, beta, eps=1e-12, out_dtype=jnp.bfloat16, tm=256):
    """Row-tiled LayerNorm (no residual input)."""
    M, H = x.shape
    tm = _tile(M, tm, 8)
    kern = functools.partial(_ln_kernel, eps=eps)
    return pl.pallas_call(
        kern,
        out_shape=jax.ShapeDtypeStruct((M, H), out_dtype),
        grid=(M // tm,),
        in_specs=[
            pl.BlockSpec((tm, H), lambda i: (i, 0)),
            pl.BlockSpec((1, H), lambda i: (0, 0)),
            pl.BlockSpec((1, H), lambda i: (0, 0)),
        ],
        out_specs=pl.BlockSpec((tm, H), lambda i: (i, 0)),
        compiler_params=pltpu.CompilerParams(
            dimension_semantics=("parallel",),
            vmem_limit_bytes=_VMEM_LIMIT),
    )(x, gamma.reshape(1, H).astype(jnp.float32),
      beta.reshape(1, H).astype(jnp.float32))


def _attn_kernel(q_ref, k_ref, v_ref, mb_ref, o_ref, *, nh, dh, scale):
    # q/k/v: (S, H) bf16 for one batch element; mb: (1, S) f32 additive mask bias.
    mb = mb_ref[...]
    q = q_ref[...]
    k = k_ref[...]
    v = v_ref[...]
    ctx = []
    for h in range(nh):                      # static unroll over heads; all ops 2-D
        sl = slice(h * dh, (h + 1) * dh)
        qh, kh, vh = q[:, sl], k[:, sl], v[:, sl]
        # QK^T via dot_general contracting the last dims (no K transpose / XLU copy).
        s = jax.lax.dot_general(qh, kh, (((1,), (1,)), ((), ())),
                                preferred_element_type=jnp.float32)
        s = s * scale + mb                   # (S, S) + (1, S) broadcast
        s = s - jnp.max(s, axis=-1, keepdims=True)
        p = jnp.exp(s)
        p = p * pl.reciprocal(jnp.sum(p, axis=-1, keepdims=True), approx=True)
        ctx.append(jnp.dot(p.astype(vh.dtype), vh,
                           preferred_element_type=jnp.float32))
    # Lane-dense (S, H) output write (H = nh*dh), no masked partial stores.
    o_ref[...] = jnp.concatenate(ctx, axis=-1).astype(o_ref.dtype)


def pallas_attention(q, k, v, mask_bias, nh):
    """Per-batch-element attention; all heads handled inside one grid step."""
    B, S, H = q.shape
    dh = H // nh
    scale = 1.0 / math.sqrt(dh)
    kern = functools.partial(_attn_kernel, nh=nh, dh=dh, scale=scale)
    qkv_spec = pl.BlockSpec((None, S, H), lambda b: (b, 0, 0))
    return pl.pallas_call(
        kern,
        out_shape=jax.ShapeDtypeStruct((B, S, H), jnp.bfloat16),
        grid=(B,),
        in_specs=[
            qkv_spec, qkv_spec, qkv_spec,
            pl.BlockSpec((None, 1, S), lambda b: (b, 0, 0)),
        ],
        out_specs=pl.BlockSpec((None, S, H), lambda b: (b, 0, 0)),
        compiler_params=pltpu.CompilerParams(
            dimension_semantics=("parallel",),
            vmem_limit_bytes=_VMEM_LIMIT),
    )(q, k, v, mask_bias)


# --------------------------- parameter initialization ----------------------

def init_params(key, cfg):
    H, I = cfg["hidden"], cfg["intermediate"]
    keys = iter(jax.random.split(key, 256))

    def normal(shape):
        # weights stored in bf16 (matmul operand dtype); biases/LN params in f32
        return (0.02 * jax.random.normal(next(keys), shape, dtype=jnp.float32)
                ).astype(jnp.bfloat16)

    params = {
        "word_emb": 0.02 * jax.random.normal(next(keys), (cfg["vocab"], H), jnp.float32),
        "pos_emb": 0.02 * jax.random.normal(next(keys), (cfg["max_pos"], H), jnp.float32),
        "type_emb": 0.02 * jax.random.normal(next(keys), (cfg["type_vocab"], H), jnp.float32),
        "emb_ln_g": jnp.ones((H,), jnp.float32),
        "emb_ln_b": jnp.zeros((H,), jnp.float32),
        "layers": [],
        "pool_w": normal((H, H)),
        "pool_b": jnp.zeros((H,), jnp.float32),
        "cls_w": normal((H, cfg["num_labels"])),
        "cls_b": jnp.zeros((cfg["num_labels"],), jnp.float32),
    }
    for _ in range(cfg["layers"]):
        params["layers"].append({
            # fused QKV projection: [H, 3H] weight, [3H] bias
            "qkv_w": normal((H, 3 * H)), "qkv_b": jnp.zeros((3 * H,), jnp.float32),
            "o_w": normal((H, H)), "o_b": jnp.zeros((H,), jnp.float32),
            "attn_ln_g": jnp.ones((H,), jnp.float32),
            "attn_ln_b": jnp.zeros((H,), jnp.float32),
            "i_w": normal((H, I)), "i_b": jnp.zeros((I,), jnp.float32),
            "f_w": normal((I, H)), "f_b": jnp.zeros((H,), jnp.float32),
            "ffn_ln_g": jnp.ones((H,), jnp.float32),
            "ffn_ln_b": jnp.zeros((H,), jnp.float32),
        })
    return params


# ------------------------------- forward pass ------------------------------

def bert_classifier_forward(params, input_ids, attention_mask, labels, cfg):
    B, S = input_ids.shape
    H = cfg["hidden"]
    NH = cfg["heads"]

    # --- embeddings (gathers = glue in plain JAX; token_type_ids assumed 0) ---
    word = jnp.take(params["word_emb"], input_ids, axis=0)          # [B, S, H]
    pos = jnp.take(params["pos_emb"], jnp.arange(S), axis=0)[None]  # [1, S, H]
    tok = params["type_emb"][0][None, None]                         # [1, 1, H]
    emb = (word + pos + tok).reshape(B * S, H).astype(jnp.float32)
    h = pallas_layernorm(emb, params["emb_ln_g"], params["emb_ln_b"])  # bf16 [B*S,H]

    # additive attention mask bias (HF-style extended mask), f32 [B, 1, S]
    mask_bias = ((1.0 - attention_mask.astype(jnp.float32)) * -1e9).reshape(B, 1, S)

    for layer in params["layers"]:
        # fused QKV projection (one GEMM, h read once)
        qkv = pallas_linear(h, layer["qkv_w"], layer["qkv_b"])        # [B*S, 3H] bf16
        q = qkv[:, :H].reshape(B, S, H)
        k = qkv[:, H:2 * H].reshape(B, S, H)
        v = qkv[:, 2 * H:].reshape(B, S, H)

        ctx = pallas_attention(q, k, v, mask_bias, NH).reshape(B * S, H)

        # attention output projection + residual + LayerNorm (fused epilogue)
        # dropout is identity in eval mode
        h = pallas_linear_residual_ln(ctx, layer["o_w"], layer["o_b"], h,
                                      layer["attn_ln_g"], layer["attn_ln_b"])

        # FFN up-proj with exact-erf GELU epilogue
        ffn = pallas_linear(h, layer["i_w"], layer["i_b"], activation="gelu")
        # FFN down-proj + residual + LayerNorm (fused epilogue)
        h = pallas_linear_residual_ln(ffn, layer["f_w"], layer["f_b"], h,
                                      layer["ffn_ln_g"], layer["ffn_ln_b"])

    # --- pooler (tanh on [CLS]) + classifier ---
    cls = h.reshape(B, S, H)[:, 0, :]                                 # [B, H]
    pooled = pallas_linear(cls, params["pool_w"], params["pool_b"],
                           activation="tanh")
    logits = pallas_linear(pooled, params["cls_w"], params["cls_b"],
                           out_dtype=jnp.float32)

    loss = None
    if labels is not None:
        logp = jax.nn.log_softmax(logits, axis=-1)
        loss = -jnp.mean(jnp.take_along_axis(logp, labels[:, None], axis=1))
    return loss, logits


# ----------------------------------- main -----------------------------------

if __name__ == "__main__":
    cfg = dict(vocab=100, hidden=32, heads=4, intermediate=64, layers=2,
               max_pos=16, type_vocab=2, num_labels=3)

    root = jax.random.PRNGKey(0)
    kp, kid = jax.random.split(root)
    params = init_params(kp, cfg)

    B, S = 2, 8
    input_ids = jax.random.randint(kid, (B, S), 0, cfg["vocab"], dtype=jnp.int32)
    attention_mask = jnp.ones((B, S), dtype=jnp.int32).at[1, 6:].set(0)
    labels = jnp.array([0, 2], dtype=jnp.int32)

    loss, logits = bert_classifier_forward(params, input_ids, attention_mask,
                                           labels, cfg)
    jax.block_until_ready((loss, logits))
    assert logits.shape == (B, cfg["num_labels"])
    assert bool(jnp.isfinite(loss))
    print("KERNEL_OK")
</pallas_src>

<mosaic_0001>
module attributes {stable_mosaic.version = 11 : i64} {
  func.func @_ln_kernel(%arg0: i32, %arg1: memref<16x32xf32, #tpu.memory_space<vmem>>, %arg2: memref<1x32xf32, #tpu.memory_space<vmem>>, %arg3: memref<1x32xf32, #tpu.memory_space<vmem>>, %arg4: memref<16x32xbf16, #tpu.memory_space<vmem>>) attributes {dimension_semantics = [#tpu.dimension_semantics<parallel>], iteration_bounds = array<i64: 1>, scalar_prefetch = 0 : i64, scratch_operands = 0 : i64, tpu.core_type = #tpu.core_type<tc>, window_params = [{transform_indices = @transform_0, window_bounds = array<i64: 16, 32>}, {pipeline_mode = #tpu.pipeline_mode<synchronous>, transform_indices = @transform_1, window_bounds = array<i64: 1, 32>}, {pipeline_mode = #tpu.pipeline_mode<synchronous>, transform_indices = @transform_2, window_bounds = array<i64: 1, 32>}, {transform_indices = @transform_3, window_bounds = array<i64: 16, 32>}]} {
    %c0 = arith.constant 0 : index
    %c0_0 = arith.constant 0 : index
    %0 = vector.load %arg1[%c0, %c0_0] : memref<16x32xf32, #tpu.memory_space<vmem>>, vector<16x32xf32>
    %cst = arith.constant dense<0.000000e+00> : vector<16xf32>
    %1 = vector.multi_reduction <add>, %0, %cst [1] : vector<16x32xf32> to vector<16xf32>
    %2 = vector.shape_cast %1 : vector<16xf32> to vector<16x1xf32>
    %cst_1 = arith.constant 3.200000e+01 : f32
    %3 = vector.broadcast %cst_1 : f32 to vector<16x1xf32>
    %4 = arith.divf %2, %3 : vector<16x1xf32>
    %5 = vector.broadcast %4 : vector<16x1xf32> to vector<16x32xf32>
    %6 = arith.subf %0, %5 : vector<16x32xf32>
    %7 = arith.mulf %6, %6 : vector<16x32xf32>
    %cst_2 = arith.constant dense<0.000000e+00> : vector<16xf32>
    %8 = vector.multi_reduction <add>, %7, %cst_2 [1] : vector<16x32xf32> to vector<16xf32>
    %9 = vector.shape_cast %8 : vector<16xf32> to vector<16x1xf32>
    %cst_3 = arith.constant 3.200000e+01 : f32
    %10 = vector.broadcast %cst_3 : f32 to vector<16x1xf32>
    %11 = arith.divf %9, %10 : vector<16x1xf32>
    %12 = vector.broadcast %4 : vector<16x1xf32> to vector<16x32xf32>
    %13 = arith.subf %0, %12 : vector<16x32xf32>
    %cst_4 = arith.constant 9.99999996E-13 : f32
    %14 = vector.broadcast %cst_4 : f32 to vector<16x1xf32>
    %15 = arith.addf %11, %14 : vector<16x1xf32>
    %16 = math.rsqrt %15 : vector<16x1xf32>
    %17 = vector.broadcast %16 : vector<16x1xf32> to vector<16x32xf32>
    %18 = arith.mulf %13, %17 : vector<16x32xf32>
    %c0_5 = arith.constant 0 : index
    %c0_6 = arith.constant 0 : index
    %19 = vector.load %arg2[%c0_5, %c0_6] : memref<1x32xf32, #tpu.memory_space<vmem>>, vector<1x32xf32>
    %20 = vector.broadcast %19 : vector<1x32xf32> to vector<16x32xf32>
    %21 = arith.mulf %18, %20 : vector<16x32xf32>
    %c0_7 = arith.constant 0 : index
    %c0_8 = arith.constant 0 : index
    %22 = vector.load %arg3[%c0_7, %c0_8] : memref<1x32xf32, #tpu.memory_space<vmem>>, vector<1x32xf32>
    %23 = vector.broadcast %22 : vector<1x32xf32> to vector<16x32xf32>
    %24 = arith.addf %21, %23 : vector<16x32xf32>
    %25 = arith.truncf %24 : vector<16x32xf32> to vector<16x32xbf16>
    %c0_9 = arith.constant 0 : index
    %c0_10 = arith.constant 0 : index
    %26 = vector.load %arg4[%c0_9, %c0_10] : memref<16x32xbf16, #tpu.memory_space<vmem>>, vector<16x32xbf16>
    tpu.vector_store %arg4[%c0_9, %c0_10], %25 {strides = array<i32>} : memref<16x32xbf16, #tpu.memory_space<vmem>>, vector<16x32xbf16>,
    return
  }
  func.func @transform_0(%arg0: i32) -> (i32, i32) {
    %c0_i32 = arith.constant 0 : i32
    %c0_i32_0 = arith.constant 0 : i32
    return %arg0, %c0_i32 : i32, i32
  }
  func.func @transform_1(%arg0: i32) -> (i32, i32) {
    %c0_i32 = arith.constant 0 : i32
    %c0_i32_0 = arith.constant 0 : i32
    %c0_i32_1 = arith.constant 0 : i32
    return %c0_i32, %c0_i32_0 : i32, i32
  }
  func.func @transform_2(%arg0: i32) -> (i32, i32) {
    %c0_i32 = arith.constant 0 : i32
    %c0_i32_0 = arith.constant 0 : i32
    %c0_i32_1 = arith.constant 0 : i32
    return %c0_i32, %c0_i32_0 : i32, i32
  }
  func.func @transform_3(%arg0: i32) -> (i32, i32) {
    %c0_i32 = arith.constant 0 : i32
    %c0_i32_0 = arith.constant 0 : i32
    return %arg0, %c0_i32 : i32, i32
  }
}

</mosaic_0001>

<llo_original>
// kernel: tpu_custom_call.1
$region0: #{tpu_custom_call.1}
  #allocation0 [shape = 'u32[]', space=smem, size = 0x4, offset = 0x4, fixed_abs, tag = 'smem constant byte address 0x4 - core index']
  #allocation1 [shape = 'u32[144,128]{1,0:T(1,128)}', space=vmem, size = 0x12000, scoped, tag = 'internal scratch']
  %s0 = inlined_call_operand.hbm [shape: f32[16,32], index: 0, kind: input, shape index: {}]
  %s1 = inlined_call_operand.vmem [shape: f32[1,32], index: 1, kind: input, shape index: {}]
  %s2 = inlined_call_operand.vmem [shape: f32[1,32], index: 2, kind: input, shape index: {}]
  %s3 = inlined_call_operand.hbm [shape: bf16[16,32], index: 3, kind: output, shape index: {}]
  %s4 = sld [smem:[#allocation0]]
  $region26: #{tpu_custom_call.1} parent=0
    _
  %s6 = ssub.s32 1, %s4
  %s7 = scalar_select 0, %s6, %s4
  $region1: #{tpu_custom_call.1} parent=0
    #allocation2 [shape = 'u8[8192]{0}', space=vmem, size = 0x2000, scoped, tag = 'input window, operand 0, single buffered']
    #allocation3 [shape = 's32[1]{0}', space=sflag, size = 0x4, scoped, tag = 'scoped memory for tpu_custom_call.1']
    #allocation4 [shape = 's32[1]{0}', space=sflag, size = 0x4, scoped, tag = 'scoped memory for tpu_custom_call.1']
    #allocation5 [shape = 'u8[4096]{0}', space=vmem, size = 0x1000, scoped, tag = 'output window, operand 0, single buffered']
    %8 = vsyncpa [#allocation3], 0
    %9 = vsyncpa [#allocation4], 0
    // Predicated region
    $region2: #{tpu_custom_call.1} parent=1 // pred_check
      _
    $region3: #{tpu_custom_call.1} parent=1 // pred_check_branch
      %11 = sbr.rel (0) target = $region5
    $region4: #{tpu_custom_call.1} parent=1 // pred_region
      %s13 = ssub.s32 256, 256
      %14 = vsyncadd [#allocation3], %s13
      %s15 = sshll.u32 [#allocation2], 4
      %s16 = int_to_ptr.vmem [resolvable:$true] %s15
      %21 = dma.hbm_to_vmem [thread:$0]  %s0, 256, %s16, [#allocation3], 128, 128, 8
    $region5: #{tpu_custom_call.1} parent=1 // pred_fallthru
      _
    // Predicated region
    $region6: #{tpu_custom_call.1} parent=1 // pred_check
      _
    $region7: #{tpu_custom_call.1} parent=1 // pred_check_branch
      %23 = sbr.rel (0) target = $region9
    $region8: #{tpu_custom_call.1} parent=1 // pred_region
      _
    $region9: #{tpu_custom_call.1} parent=1 // pred_fallthru
      _
    // Predicated region
    $region10: #{tpu_custom_call.1} parent=1 // pred_check
      _
    $region11: #{tpu_custom_call.1} parent=1 // pred_check_branch
      %25 = sbr.rel (0) target = $region13
    $region12: #{tpu_custom_call.1} parent=1 // pred_region
      _
    $region13: #{tpu_custom_call.1} parent=1 // pred_fallthru
      _
    // Predicated region
    $region14: #{tpu_custom_call.1} parent=1 // pred_check
      _
    $region15: #{tpu_custom_call.1} parent=1 // pred_check_branch
      %27 = sbr.rel (0) target = $region17
    $region16: #{tpu_custom_call.1} parent=1 // pred_region
      %28 = dma.done [#allocation3], 256
    $region17: #{tpu_custom_call.1} parent=1 // pred_fallthru
      _
    %v29 = vld [vmem:[#allocation2] sm:$0xff]
    %v30 = vld [vmem:[#allocation2 + $0x8] sm:$0xff]
    %vm31 = vcmask 261120
    %v32 = vsel %vm31, %v29, 0.0
    %33 = vadd.xlane.f32.xlu0 %v32
    %v34 = vpop.xlane.xlu0 %33
    %v35 = vsel %vm31, %v30, 0.0
    %36 = vadd.xlane.f32.xlu0 %v35
    %v37 = vpop.xlane.xlu0 %36
    %v38 = vrcp.pop 32.0
    %v39 = vmul.f32 %v34, %v38
    %v40 = vmul.f32 %v37, %v38
    %v41 = vsub.f32 %v29, %v39
    %v42 = vsub.f32 %v30, %v40
    %v43 = vmul.f32 %v41, %v41
    %v44 = vmul.f32 %v42, %v42
    %v45 = vsel %vm31, %v43, 0.0
    %46 = vadd.xlane.f32.xlu0 %v45
    %v47 = vpop.xlane.xlu0 %46
    %v48 = vsel %vm31, %v44, 0.0
    %49 = vadd.xlane.f32.xlu0 %v48
    %v50 = vpop.xlane.xlu0 %49
    %v51 = vmul.f32 %v47, %v38
    %v52 = vmul.f32 %v50, %v38
    %v53 = vadd.f32 %v51, 1e-12
    %v54 = vadd.f32 %v52, 1e-12
    %v55 = vrsqrt.pop %v53
    %v56 = vrsqrt.pop %v54
    %v57 = vmul.f32 %v41, %v55
    %v58 = vmul.f32 %v42, %v56
    %v59 = vld [vmem:[%s1] sm:$0x1]
    %v61 = vlaneseq
    %v62 = vshrl.u32 %v61, 7
    %v63 = vsub.s32 0, %v62
    %v64 = vrot.slane %v59, %v63
    %v66 = vmul.f32 %v57, %v64
    %v67 = vmul.f32 %v58, %v64
    %v68 = vld [vmem:[%s2] sm:$0x1]
    %v70 = vlaneseq
    %v71 = vshrl.u32 %v70, 7
    %v72 = vsub.s32 0, %v71
    %v73 = vrot.slane %v68, %v72
    %v75 = vadd.f32 %v66, %v73
    %v76 = vadd.f32 %v67, %v73
    %v77 = vpack.c.bf16 %v76, %v75
    %v79 = vunpack.c.l.b16 %v77
    %v80 = vunpack.c.h.b16 %v77
    %v81 = vpack.c.b16 %v79, %v79
    %v82 = vpack.c.b16 %v80, %v80
    %vm85 = vcmask 257024
    %86 = vst.msk [vmem:[#allocation5] sm:$0xf] %vm85, %v81
    %87 = vst.msk [vmem:[#allocation5 + $0x4] sm:$0xf] %vm85, %v82
    // Predicated region
    $region18: #{tpu_custom_call.1} parent=1 // pred_check
      _
    $region19: #{tpu_custom_call.1} parent=1 // pred_check_branch
      %89 = sbr.rel (0) target = $region21
    $region20: #{tpu_custom_call.1} parent=1 // pred_region
      %s91 = ssub.s32 128, 128
      %92 = vsyncadd [#allocation4], %s91
      %s93 = sshll.u32 [#allocation5], 4
      %s94 = int_to_ptr.vmem [resolvable:$true] %s93
      %99 = dma.vmem_to_hbm [thread:$0]  %s94, 128, %s3, [#allocation4], 64, 64, 4
    $region21: #{tpu_custom_call.1} parent=1 // pred_fallthru
      _
    // Predicated region
    $region22: #{tpu_custom_call.1} parent=1 // pred_check
      _
    $region23: #{tpu_custom_call.1} parent=1 // pred_check_branch
      %101 = sbr.rel (0) target = $region25
    $region24: #{tpu_custom_call.1} parent=1 // pred_region
      %102 = dma.done [#allocation4], 128
    $region25: #{tpu_custom_call.1} parent=1 // pred_fallthru
      _
    %103 = vsyncpa [#allocation3], 1
    %104 = vsyncpa [#allocation4], 1

</llo_original>
